<compile_context>
chip_gen: v6e
topology: v6e:2x2x1
jax: 0.10.0
libtpu: 0.0.40
codegen_flags: <defaults>
</compile_context>

<pallas_src>
import jax
import jax.numpy as jnp
from jax.experimental import pallas as pl
from jax.experimental.pallas import tpu as pltpu

IN_F, HID_F, OUT_F = 20, 256, 10


def _round_up(x, m):
    return ((x + m - 1) // m) * m


def _choose_tile(B, block_rows, min_tiles=2):
    """Pick an 8-aligned batch tile that (a) is <= block_rows, (b) gives >= min_tiles
    grid steps when the batch allows (dual-TC v7x), and (c) avoids gross over-padding."""
    b8 = _round_up(B, 8)
    n_tiles = max(pl.cdiv(b8, block_rows), min(min_tiles, b8 // 8))
    bt = _round_up(pl.cdiv(b8, n_tiles), 8)
    b_pad = _round_up(b8, bt)
    return bt, b_pad


def mlp_kernel(x_ref, w1_ref, b1_ref, w2_ref, b2_ref, o_ref):
    # Hidden layer: [bt,20] @ [20,256] + [1,256] -> ReLU (bias broadcast over rows).
    h = jnp.dot(x_ref[...], w1_ref[...], preferred_element_type=jnp.float32)
    h = jnp.maximum(h + b1_ref[...], 0.0)
    # Output layer: [bt,256] @ [256,10] + [1,10]; written directly at logical width.
    y = jnp.dot(h, w2_ref[...], preferred_element_type=jnp.float32)
    o_ref[...] = (y + b2_ref[...]).astype(o_ref.dtype)


def mlp_forward(x, w1, b1, w2, b2, *, block_rows=1024):
    """x:[B,20], w1:[20,256], b1:[1,256], w2:[256,10], b2:[1,10] -> [B,10]."""
    B = x.shape[0]
    bt, b_pad = _choose_tile(B, block_rows)

    # Only remaining wrapper-side pad: batch rows up to a tile multiple (zeros).
    xp = jnp.pad(x, ((0, b_pad - B), (0, 0))) if b_pad != B else x

    grid = (b_pad // bt,)

    cost = pl.CostEstimate(
        flops=2 * b_pad * (IN_F * HID_F + HID_F * OUT_F),
        transcendentals=0,
        bytes_accessed=4 * (b_pad * IN_F + w1.size + b1.size + w2.size + b2.size
                            + b_pad * OUT_F),
    )

    out = pl.pallas_call(
        mlp_kernel,
        out_shape=jax.ShapeDtypeStruct((b_pad, OUT_F), jnp.float32),
        grid=grid,
        in_specs=[
            pl.BlockSpec((bt, IN_F), lambda i: (i, 0)),        # x: tiled over batch
            pl.BlockSpec((IN_F, HID_F), lambda i: (0, 0)),     # w1: resident
            pl.BlockSpec((1, HID_F), lambda i: (0, 0)),        # b1: resident
            pl.BlockSpec((HID_F, OUT_F), lambda i: (0, 0)),    # w2: resident
            pl.BlockSpec((1, OUT_F), lambda i: (0, 0)),        # b2: resident
        ],
        out_specs=pl.BlockSpec((bt, OUT_F), lambda i: (i, 0)),
        compiler_params=pltpu.CompilerParams(
            dimension_semantics=("parallel",),       # shard batch tiles across TCs (v7x)
            vmem_limit_bytes=32 * 1024 * 1024,       # headroom vs v7x 64 MiB physical VMEM
        ),
        cost_estimate=cost,
    )(xp, w1, b1, w2, b2)

    # Slice away only the batch padding; lane width is already logical (10).
    return out[:B] if b_pad != B else out


def init_params(key):
    # Deterministic init mimicking PyTorch nn.Linear default (uniform +/- 1/sqrt(fan_in)).
    k1, k2, k3, k4 = jax.random.split(key, 4)
    bound1 = 1.0 / jnp.sqrt(IN_F)
    bound2 = 1.0 / jnp.sqrt(HID_F)
    w1 = jax.random.uniform(k1, (IN_F, HID_F), jnp.float32, -bound1, bound1)
    b1 = jax.random.uniform(k2, (1, HID_F), jnp.float32, -bound1, bound1)
    w2 = jax.random.uniform(k3, (HID_F, OUT_F), jnp.float32, -bound2, bound2)
    b2 = jax.random.uniform(k4, (1, OUT_F), jnp.float32, -bound2, bound2)
    return w1, b1, w2, b2


if __name__ == "__main__":
    key = jax.random.PRNGKey(0)
    kx, kp, kx2 = jax.random.split(key, 3)
    w1, b1, w2, b2 = init_params(kp)

    # Small-batch path (single tile), jitted so the batch pad fuses with the call.
    B = 8
    x = jax.random.normal(kx, (B, IN_F), jnp.float32)
    fwd = jax.jit(mlp_forward)
    out = jax.block_until_ready(fwd(x, w1, b1, w2, b2))
    ref = jnp.maximum(x @ w1 + b1, 0.0) @ w2 + b2
    assert out.shape == (B, OUT_F)
    assert jnp.allclose(out, ref, atol=1e-5, rtol=1e-5)

    # Multi-tile path with batch padding (exercises grid > 1 and the balanced-tile logic).
    B2 = 50
    x2 = jax.random.normal(kx2, (B2, IN_F), jnp.float32)
    out2 = jax.block_until_ready(mlp_forward(x2, w1, b1, w2, b2, block_rows=16))
    ref2 = jnp.maximum(x2 @ w1 + b1, 0.0) @ w2 + b2
    assert out2.shape == (B2, OUT_F)
    assert jnp.allclose(out2, ref2, atol=1e-5, rtol=1e-5)

    print("KERNEL_OK")
</pallas_src>

<mosaic_0001>
module attributes {stable_mosaic.version = 11 : i64} {
  func.func @mlp_kernel(%arg0: i32, %arg1: memref<8x20xf32, #tpu.memory_space<vmem>>, %arg2: memref<20x256xf32, #tpu.memory_space<vmem>>, %arg3: memref<1x256xf32, #tpu.memory_space<vmem>>, %arg4: memref<256x10xf32, #tpu.memory_space<vmem>>, %arg5: memref<1x10xf32, #tpu.memory_space<vmem>>, %arg6: memref<8x10xf32, #tpu.memory_space<vmem>>) attributes {dimension_semantics = [#tpu.dimension_semantics<parallel>], iteration_bounds = array<i64: 1>, scalar_prefetch = 0 : i64, scratch_operands = 0 : i64, tpu.core_type = #tpu.core_type<tc>, window_params = [{transform_indices = @transform_0, window_bounds = array<i64: 8, 20>}, {pipeline_mode = #tpu.pipeline_mode<synchronous>, transform_indices = @transform_1, window_bounds = array<i64: 20, 256>}, {pipeline_mode = #tpu.pipeline_mode<synchronous>, transform_indices = @transform_2, window_bounds = array<i64: 1, 256>}, {pipeline_mode = #tpu.pipeline_mode<synchronous>, transform_indices = @transform_3, window_bounds = array<i64: 256, 10>}, {pipeline_mode = #tpu.pipeline_mode<synchronous>, transform_indices = @transform_4, window_bounds = array<i64: 1, 10>}, {transform_indices = @transform_5, window_bounds = array<i64: 8, 10>}]} {
    %c0 = arith.constant 0 : index
    %c0_0 = arith.constant 0 : index
    %0 = vector.load %arg1[%c0, %c0_0] : memref<8x20xf32, #tpu.memory_space<vmem>>, vector<8x20xf32>
    %c0_1 = arith.constant 0 : index
    %c0_2 = arith.constant 0 : index
    %1 = vector.load %arg2[%c0_1, %c0_2] : memref<20x256xf32, #tpu.memory_space<vmem>>, vector<20x256xf32>
    %cst = arith.constant dense<0.000000e+00> : vector<8x256xf32>
    %2 = tpu.matmul %0, %1, %cst {dimension_numbers = #tpu.dot_dimension_numbers<[1], [0], [0], [1], [0, 0, 1, 1], [], []>} : vector<8x20xf32>, vector<20x256xf32>, vector<8x256xf32> -> vector<8x256xf32>
    %c0_3 = arith.constant 0 : index
    %c0_4 = arith.constant 0 : index
    %3 = vector.load %arg3[%c0_3, %c0_4] : memref<1x256xf32, #tpu.memory_space<vmem>>, vector<1x256xf32>
    %4 = vector.broadcast %3 : vector<1x256xf32> to vector<8x256xf32>
    %5 = arith.addf %2, %4 : vector<8x256xf32>
    %cst_5 = arith.constant 0.000000e+00 : f32
    %6 = vector.broadcast %cst_5 : f32 to vector<8x256xf32>
    %7 = arith.maximumf %5, %6 : vector<8x256xf32>
    %c0_6 = arith.constant 0 : index
    %c0_7 = arith.constant 0 : index
    %8 = vector.load %arg4[%c0_6, %c0_7] : memref<256x10xf32, #tpu.memory_space<vmem>>, vector<256x10xf32>
    %cst_8 = arith.constant dense<0.000000e+00> : vector<8x10xf32>
    %9 = tpu.matmul %7, %8, %cst_8 {dimension_numbers = #tpu.dot_dimension_numbers<[1], [0], [0], [1], [0, 0, 1, 1], [], []>} : vector<8x256xf32>, vector<256x10xf32>, vector<8x10xf32> -> vector<8x10xf32>
    %c0_9 = arith.constant 0 : index
    %c0_10 = arith.constant 0 : index
    %10 = vector.load %arg5[%c0_9, %c0_10] : memref<1x10xf32, #tpu.memory_space<vmem>>, vector<1x10xf32>
    %11 = vector.broadcast %10 : vector<1x10xf32> to vector<8x10xf32>
    %12 = arith.addf %9, %11 : vector<8x10xf32>
    %c0_11 = arith.constant 0 : index
    %c0_12 = arith.constant 0 : index
    %13 = vector.load %arg6[%c0_11, %c0_12] : memref<8x10xf32, #tpu.memory_space<vmem>>, vector<8x10xf32>
    tpu.vector_store %arg6[%c0_11, %c0_12], %12 {strides = array<i32>} : memref<8x10xf32, #tpu.memory_space<vmem>>, vector<8x10xf32>,
    return
  }
  func.func @transform_0(%arg0: i32) -> (i32, i32) {
    %c0_i32 = arith.constant 0 : i32
    %c0_i32_0 = arith.constant 0 : i32
    return %arg0, %c0_i32 : i32, i32
  }
  func.func @transform_1(%arg0: i32) -> (i32, i32) {
    %c0_i32 = arith.constant 0 : i32
    %c0_i32_0 = arith.constant 0 : i32
    %c0_i32_1 = arith.constant 0 : i32
    return %c0_i32, %c0_i32_0 : i32, i32
  }
  func.func @transform_2(%arg0: i32) -> (i32, i32) {
    %c0_i32 = arith.constant 0 : i32
    %c0_i32_0 = arith.constant 0 : i32
    %c0_i32_1 = arith.constant 0 : i32
    return %c0_i32, %c0_i32_0 : i32, i32
  }
  func.func @transform_3(%arg0: i32) -> (i32, i32) {
    %c0_i32 = arith.constant 0 : i32
    %c0_i32_0 = arith.constant 0 : i32
    %c0_i32_1 = arith.constant 0 : i32
    return %c0_i32, %c0_i32_0 : i32, i32
  }
  func.func @transform_4(%arg0: i32) -> (i32, i32) {
    %c0_i32 = arith.constant 0 : i32
    %c0_i32_0 = arith.constant 0 : i32
    %c0_i32_1 = arith.constant 0 : i32
    return %c0_i32, %c0_i32_0 : i32, i32
  }
  func.func @transform_5(%arg0: i32) -> (i32, i32) {
    %c0_i32 = arith.constant 0 : i32
    %c0_i32_0 = arith.constant 0 : i32
    return %arg0, %c0_i32 : i32, i32
  }
}

</mosaic_0001>

<llo_original>
// kernel: mlp_forward.1
$region0: #{mlp_forward.1}
  #allocation0 [shape = 'u32[]', space=smem, size = 0x4, offset = 0x4, fixed_abs, tag = 'smem constant byte address 0x4 - core index']
  #allocation1 [shape = 'u32[144,128]{1,0:T(1,128)}', space=vmem, size = 0x12000, scoped, tag = 'internal scratch']
  %s0 = inlined_call_operand.vmem [shape: f32[8,20], index: 0, kind: input, shape index: {}]
  %s1 = inlined_call_operand.vmem [shape: f32[20,256], index: 1, kind: input, shape index: {}]
  %s2 = inlined_call_operand.vmem [shape: f32[1,256], index: 2, kind: input, shape index: {}]
  %s3 = inlined_call_operand.vmem [shape: f32[256,10], index: 3, kind: input, shape index: {}]
  %s4 = inlined_call_operand.vmem [shape: f32[1,10], index: 4, kind: input, shape index: {}]
  %s5 = inlined_call_operand.hbm [shape: f32[8,10], index: 5, kind: output, shape index: {}]
  %s6 = sld [smem:[#allocation0]]
  $region30: #{mlp_forward.1} parent=0
    _
  %s8 = ssub.s32 1, %s6
  %s9 = scalar_select 0, %s8, %s6
  $region1: #{mlp_forward.1} parent=0
    #allocation2 [shape = 'u8[4096]{0}', space=vmem, size = 0x1000, scoped, tag = 'output window, operand 0, single buffered']
    #allocation3 [shape = 's32[1]{0}', space=sflag, size = 0x4, scoped, tag = 'scoped memory for mlp_forward.1']
    %10 = vsyncpa [#allocation3], 0
    // Predicated region
    $region2: #{mlp_forward.1} parent=1 // pred_check
      _
    $region3: #{mlp_forward.1} parent=1 // pred_check_branch
      %12 = sbr.rel (0) target = $region5
    $region4: #{mlp_forward.1} parent=1 // pred_region
      _
    $region5: #{mlp_forward.1} parent=1 // pred_fallthru
      _
    // Predicated region
    $region6: #{mlp_forward.1} parent=1 // pred_check
      _
    $region7: #{mlp_forward.1} parent=1 // pred_check_branch
      %14 = sbr.rel (0) target = $region9
    $region8: #{mlp_forward.1} parent=1 // pred_region
      _
    $region9: #{mlp_forward.1} parent=1 // pred_fallthru
      _
    // Predicated region
    $region10: #{mlp_forward.1} parent=1 // pred_check
      _
    $region11: #{mlp_forward.1} parent=1 // pred_check_branch
      %16 = sbr.rel (0) target = $region13
    $region12: #{mlp_forward.1} parent=1 // pred_region
      _
    $region13: #{mlp_forward.1} parent=1 // pred_fallthru
      _
    // Predicated region
    $region14: #{mlp_forward.1} parent=1 // pred_check
      _
    $region15: #{mlp_forward.1} parent=1 // pred_check_branch
      %18 = sbr.rel (0) target = $region17
    $region16: #{mlp_forward.1} parent=1 // pred_region
      _
    $region17: #{mlp_forward.1} parent=1 // pred_fallthru
      _
    // Predicated region
    $region18: #{mlp_forward.1} parent=1 // pred_check
      _
    $region19: #{mlp_forward.1} parent=1 // pred_check_branch
      %20 = sbr.rel (0) target = $region21
    $region20: #{mlp_forward.1} parent=1 // pred_region
      _
    $region21: #{mlp_forward.1} parent=1 // pred_fallthru
      _
    %v21 = vld [vmem:[%s0] sm:$0xff]
    %v22 = vld [vmem:[%s1] sm:$0xff]
    %v23 = vld [vmem:[%s1 + $0x8] sm:$0xff]
    %v24 = vld [vmem:[%s1 + $0x10] sm:$0xff]
    %v25 = vld [vmem:[%s1 + $0x18] sm:$0xff]
    %v26 = vld [vmem:[%s1 + $0x20] sm:$0xf]
    %v27 = vld [vmem:[%s1 + $0x28] sm:$0xf]
    %v28 = vld [vmem:[%s2] sm:$0x3]
    %v30 = vlaneseq
    %v31 = vshrl.u32 %v30, 7
    %v32 = vsub.s32 0, %v31
    %v33 = vrot.slane %v28, %v32
    %v34 = vlaneseq
    %v35 = vshrl.u32 %v34, 7
    %v36 = vsub.s32 1, %v35
    %v37 = vrot.slane %v28, %v36
    %vm40 = vcmask 162816
    %v42 = vsel %vm40, %v21, 0
    %vm44 = vcmask 1043456
    %v46 = vsel %vm44, %v26, 0
    %v49 = vsel %vm44, %v27, 0
    %51 = vmatprep.subr.mxu0 0.0
    %52 = vmatpush1.msra.mxu0 0.0
    %53 = vmatprep.subr.mxu0 0.0
    %54 = vmatpush1.msra.mxu0 0.0
    %55 = vmatprep.subr.mxu0 0.0
    %56 = vmatpush1.msra.mxu0 0.0
    %57 = vmatprep.subr.mxu0 0.0
    %58 = vmatpush1.msra.mxu0 0.0
    %59 = vmatprep.subr.mxu0 0.0
    %60 = vmatpush1.msra.mxu0 0.0
    %61 = vmatprep.subr.mxu0 0.0
    %62 = vmatpush1.msra.mxu0 0.0
    %63 = vmatprep.subr.mxu0 0.0
    %64 = vmatpush1.msra.mxu0 0.0
    %65 = vmatprep.subr.mxu0 0.0
    %66 = vmatpush1.msra.mxu0 0.0
    %67 = vmatprep.subr.mxu0 0.0
    %68 = vmatpush1.msra.mxu0 0.0
    %69 = vmatprep.subr.mxu0 0.0
    %70 = vmatpush1.msra.mxu0 0.0
    %71 = vmatprep.subr.mxu0 0.0
    %72 = vmatpush1.msra.mxu0 0.0
    %73 = vmatprep.subr.mxu0 0.0
    %74 = vmatpush1.msra.mxu0 0.0
    %75 = vmatprep.subr.mxu0 0.0
    %76 = vmatpush1.msra.mxu0 0.0
    %77 = vmatprep.subr.mxu0 %v49
    %78 = vmatpush1.msra.mxu0 %v46
    %79 = vmatprep.subr.mxu0 %v25
    %80 = vmatpush1.msra.mxu0 %v24
    %81 = vmatprep.subr.mxu0 %v23
    %82 = vmatpush1.msra.mxu0 %v22
    %83 = vmatprep.subr.mxu0 0.0
    %84 = vmatpush2.msra.mxu0 0.0
    %85 = vmatprep.subr.mxu0 0.0
    %86 = vmatpush2.msra.mxu0 0.0
    %87 = vmatprep.subr.mxu0 0.0
    %88 = vmatpush2.msra.mxu0 0.0
    %89 = vmatprep.subr.mxu0 0.0
    %90 = vmatpush2.msra.mxu0 0.0
    %91 = vmatprep.subr.mxu0 0.0
    %92 = vmatpush2.msra.mxu0 0.0
    %93 = vmatprep.subr.mxu0 0.0
    %94 = vmatpush2.msra.mxu0 0.0
    %95 = vmatprep.subr.mxu0 0.0
    %96 = vmatpush2.msra.mxu0 0.0
    %97 = vmatprep.subr.mxu0 0.0
    %98 = vmatpush2.msra.mxu0 0.0
    %99 = vmatprep.subr.mxu0 0.0
    %100 = vmatpush2.msra.mxu0 0.0
    %101 = vmatprep.subr.mxu0 0.0
    %102 = vmatpush2.msra.mxu0 0.0
    %103 = vmatprep.subr.mxu0 0.0
    %104 = vmatpush2.msra.mxu0 0.0
    %105 = vmatprep.subr.mxu0 0.0
    %106 = vmatpush2.msra.mxu0 0.0
    %107 = vmatprep.subr.mxu0 0.0
    %108 = vmatpush2.msra.mxu0 0.0
    %109 = vmatprep.subr.mxu0 0.0
    %110 = vmatpush2.msra.mxu0 0.0
    %111 = vmatprep.subr.mxu0 0.0
    %112 = vmatpush2.msra.mxu0 0.0
    %113 = vmatprep.subr.mxu0 0.0
    %114 = vmatpush2.msra.mxu0 0.0
    %115 = vmatprep.mubr.f32.mxu0 0.0
    %116 = vmatmul.mubr.f32.gmra.mxu0 %v42
    %v117 = vpop.f32.mrf.mxu0
    %v118 = vadd.f32 %v33, %v117
    %v119 = vpop.f32.mrf.mxu0
    %v120 = vadd.f32 %v37, %v119
    %121 = vdwg.mxu0
    %v122 = vmax.f32 %v118, 0.0
    %v123 = vmax.f32 %v120, 0.0
    %v124 = vld [vmem:[%s3] sm:$0xff]
    %v125 = vld [vmem:[%s3 + $0x8] sm:$0xff]
    %v126 = vld [vmem:[%s3 + $0x10] sm:$0xff]
    %v127 = vld [vmem:[%s3 + $0x18] sm:$0xff]
    %v128 = vld [vmem:[%s3 + $0x20] sm:$0xff]
    %v129 = vld [vmem:[%s3 + $0x28] sm:$0xff]
    %v130 = vld [vmem:[%s3 + $0x30] sm:$0xff]
    %v131 = vld [vmem:[%s3 + $0x38] sm:$0xff]
    %v132 = vld [vmem:[%s3 + $0x40] sm:$0xff]
    %v133 = vld [vmem:[%s3 + $0x48] sm:$0xff]
    %v134 = vld [vmem:[%s3 + $0x50] sm:$0xff]
    %v135 = vld [vmem:[%s3 + $0x58] sm:$0xff]
    %v136 = vld [vmem:[%s3 + $0x60] sm:$0xff]
    %v137 = vld [vmem:[%s3 + $0x68] sm:$0xff]
    %v138 = vld [vmem:[%s3 + $0x70] sm:$0xff]
    %v139 = vld [vmem:[%s3 + $0x78] sm:$0xff]
    %v140 = vld [vmem:[%s3 + $0x80] sm:$0xff]
    %v141 = vld [vmem:[%s3 + $0x88] sm:$0xff]
    %v142 = vld [vmem:[%s3 + $0x90] sm:$0xff]
    %v143 = vld [vmem:[%s3 + $0x98] sm:$0xff]
    %v144 = vld [vmem:[%s3 + $0xa0] sm:$0xff]
    %v145 = vld [vmem:[%s3 + $0xa8] sm:$0xff]
    %v146 = vld [vmem:[%s3 + $0xb0] sm:$0xff]
    %v147 = vld [vmem:[%s3 + $0xb8] sm:$0xff]
    %v148 = vld [vmem:[%s3 + $0xc0] sm:$0xff]
    %v149 = vld [vmem:[%s3 + $0xc8] sm:$0xff]
    %v150 = vld [vmem:[%s3 + $0xd0] sm:$0xff]
    %v151 = vld [vmem:[%s3 + $0xd8] sm:$0xff]
    %v152 = vld [vmem:[%s3 + $0xe0] sm:$0xff]
    %v153 = vld [vmem:[%s3 + $0xe8] sm:$0xff]
    %v154 = vld [vmem:[%s3 + $0xf0] sm:$0xff]
    %v155 = vld [vmem:[%s3 + $0xf8] sm:$0xff]
    %v156 = vld [vmem:[%s4] sm:$0x1]
    %v158 = vlaneseq
    %v159 = vshrl.u32 %v158, 7
    %v160 = vsub.s32 0, %v159
    %v161 = vrot.slane %v156, %v160
    %163 = vmatprep.subr.mxu0 0.0
    %164 = vmatpush1.msra.mxu0 %v139
    %165 = vmatprep.subr.mxu0 0.0
    %166 = vmatpush1.msra.mxu0 %v138
    %167 = vmatprep.subr.mxu0 0.0
    %168 = vmatpush1.msra.mxu0 %v137
    %169 = vmatprep.subr.mxu0 0.0
    %170 = vmatpush1.msra.mxu0 %v136
    %171 = vmatprep.subr.mxu0 0.0
    %172 = vmatpush1.msra.mxu0 %v135
    %173 = vmatprep.subr.mxu0 0.0
    %174 = vmatpush1.msra.mxu0 %v134
    %175 = vmatprep.subr.mxu0 0.0
    %176 = vmatpush1.msra.mxu0 %v133
    %177 = vmatprep.subr.mxu0 0.0
    %178 = vmatpush1.msra.mxu0 %v132
    %179 = vmatprep.subr.mxu0 0.0
    %180 = vmatpush1.msra.mxu0 %v131
    %181 = vmatprep.subr.mxu0 0.0
    %182 = vmatpush1.msra.mxu0 %v130
    %183 = vmatprep.subr.mxu0 0.0
    %184 = vmatpush1.msra.mxu0 %v129
    %185 = vmatprep.subr.mxu0 0.0
    %186 = vmatpush1.msra.mxu0 %v128
    %187 = vmatprep.subr.mxu0 0.0
    %188 = vmatpush1.msra.mxu0 %v127
    %189 = vmatprep.subr.mxu0 0.0
    %190 = vmatpush1.msra.mxu0 %v126
    %191 = vmatprep.subr.mxu0 0.0
    %192 = vmatpush1.msra.mxu0 %v125
    %193 = vmatprep.subr.mxu0 0.0
    %194 = vmatpush1.msra.mxu0 %v124
    %195 = vmatprep.subr.mxu0 0.0
    %196 = vmatpush2.msra.mxu0 %v155
    %197 = vmatprep.subr.mxu0 0.0
    %198 = vmatpush2.msra.mxu0 %v154
    %199 = vmatprep.subr.mxu0 0.0
    %200 = vmatpush2.msra.mxu0 %v153
    %201 = vmatprep.subr.mxu0 0.0
    %202 = vmatpush2.msra.mxu0 %v152
    %203 = vmatprep.subr.mxu0 0.0
    %204 = vmatpush2.msra.mxu0 %v151
    %205 = vmatprep.subr.mxu0 0.0
    %206 = vmatpush2.msra.mxu0 %v150
    %207 = vmatprep.subr.mxu0 0.0
    %208 = vmatpush2.msra.mxu0 %v149
    %209 = vmatprep.subr.mxu0 0.0
    %210 = vmatpush2.msra.mxu0 %v148
    %211 = vmatprep.subr.mxu0 0.0
    %212 = vmatpush2.msra.mxu0 %v147
    %213 = vmatprep.subr.mxu0 0.0
    %214 = vmatpush2.msra.mxu0 %v146
    %215 = vmatprep.subr.mxu0 0.0
    %216 = vmatpush2.msra.mxu0 %v145
    %217 = vmatprep.subr.mxu0 0.0
    %218 = vmatpush2.msra.mxu0 %v144
    %219 = vmatprep.subr.mxu0 0.0
    %220 = vmatpush2.msra.mxu0 %v143
    %221 = vmatprep.subr.mxu0 0.0
    %222 = vmatpush2.msra.mxu0 %v142
    %223 = vmatprep.subr.mxu0 0.0
    %224 = vmatpush2.msra.mxu0 %v141
    %225 = vmatprep.subr.mxu0 0.0
    %226 = vmatpush2.msra.mxu0 %v140
    %227 = vmatprep.mubr.f32.mxu0 %v123
    %228 = vmatmul.mubr.f32.gmra.mxu0 %v122
    %v229 = vpop.f32.mrf.mxu0
    %v230 = vadd.f32 %v161, %v229
    %v231 = vpop.f32.mrf.mxu0
    %232 = vdwg.mxu0
    %vm233 = vcmask 80896
    %234 = vst.msk [vmem:[#allocation2] sm:$0xff] %vm233, %v230
    // Predicated region
    $region22: #{mlp_forward.1} parent=1 // pred_check
      _
    $region23: #{mlp_forward.1} parent=1 // pred_check_branch
      %236 = sbr.rel (0) target = $region25
    $region24: #{mlp_forward.1} parent=1 // pred_region
      %s238 = ssub.s32 128, 128
      %239 = vsyncadd [#allocation3], %s238
      %s241 = sshll.u32 [#allocation2], 4
      %s242 = int_to_ptr.vmem [resolvable:$true] %s241
      %244 = dma.vmem_to_hbm [thread:$0]  %s242, 128, %s5, [#allocation3]
    $region25: #{mlp_forward.1} parent=1 // pred_fallthru
      _
    // Predicated region
    $region26: #{mlp_forward.1} parent=1 // pred_check
      _
    $region27: #{mlp_forward.1} parent=1 // pred_check_branch
      %246 = sbr.rel (0) target = $region29
    $region28: #{mlp_forward.1} parent=1 // pred_region
      %247 = dma.done [#allocation3], 128
    $region29: #{mlp_forward.1} parent=1 // pred_fallthru
      _
    %248 = vsyncpa [#allocation3], 1

</llo_original>
